<compile_context>
chip_gen: v6e
topology: v6e:2x2x1
jax: 0.10.0
libtpu: 0.0.40
codegen_flags: <defaults>
</compile_context>

<pallas_src>
import functools

import jax
import jax.numpy as jnp
from jax.experimental import pallas as pl
from jax.experimental.pallas import tpu as pltpu


# ----------------------------------------------------------------------------
# Fused 3-layer kernel
# ----------------------------------------------------------------------------
def _fused_coupling_kernel(x_ref, mask_ref,
                           w1_ref, b1_ref, w2_ref, b2_ref, w3_ref, b3_ref,
                           o_ref, buf1, buf2,
                           *, K, r, Wout, halo):
    """One grid step: Bn lane-packed batch segments, all three conv layers.

    x_ref  : (1, Cin_p, Bn*P)   zero-padded, lane-packed input block
    mask_ref: (1, Wout) f32     1.0 on valid output lanes, 0.0 on gap lanes
    wX_ref : (K, RowsX, ColsX)  per-tap weight matrices (sublane-padded)
    bX_ref : (RowsX, 1) f32     biases (zero-padded rows)
    o_ref  : (1, Cout, Wout)    lane-dense packed output slab
    bufX   : (H_p, halo+Wout+r) VMEM scratch (padded hidden activations)
    """
    # Zero only the small halo margins the convs read but never write.  The
    # interior [halo, halo+Wout) is fully overwritten every step (with the gap
    # lanes re-zeroed via `mask`), so no full-buffer memset is needed and no
    # cross-grid-step scratch persistence is assumed (megacore-safe).
    if r:
        for buf in (buf1, buf2):
            buf[:, halo - r: halo] = jnp.zeros((buf.shape[0], r), buf.dtype)
            buf[:, halo + Wout:] = jnp.zeros(
                (buf.shape[0], buf.shape[1] - halo - Wout), buf.dtype)

    mask = mask_ref[...]                                    # (1, Wout) f32

    def conv(slice_fn, w_ref, b_ref):
        # "same" conv as K accumulated MXU matmuls (avoids materializing a
        # (K*C, Wout) im2col temp); f32 accumulation.
        acc = b_ref[...].astype(jnp.float32)                # (rows, 1) -> bcast
        for k in range(K):                                  # K static & small
            acc = acc + jnp.dot(w_ref[k], slice_fn(k),
                                preferred_element_type=jnp.float32)
        return acc                                          # (rows, Wout) f32

    # ---- layer 1: conv + ReLU, aligned re-pad store into buf1 ---------------
    x2d = x_ref[0]                                          # (Cin_p, Bn*P)
    h1 = jnp.maximum(conv(lambda k: x2d[:, k: k + Wout], w1_ref, b1_ref), 0.0)
    buf1[:, halo: halo + Wout] = (h1 * mask).astype(buf1.dtype)

    # ---- layer 2: conv + ReLU, aligned re-pad store into buf2 ---------------
    h2 = jnp.maximum(
        conv(lambda k: buf1[:, halo - r + k: halo - r + k + Wout],
             w2_ref, b2_ref), 0.0)
    buf2[:, halo: halo + Wout] = (h2 * mask).astype(buf2.dtype)

    # ---- layer 3: conv (no ReLU), one wide lane-dense output store ----------
    y = conv(lambda k: buf2[:, halo - r + k: halo - r + k + Wout],
             w3_ref, b3_ref)                                # (Cout, Wout)
    o_ref[0] = y.astype(o_ref.dtype)


def _round_up(v, m):
    return ((v + m - 1) // m) * m


def _pick_bn(N, P, per_lane_bytes, *, target_lanes=4096, budget_bytes=16 << 20):
    """Lane-packing factor: as many batch segments per step as the lane target
    and VMEM budget allow; keep >=2 grid steps when blocks stay large so the
    'parallel' grid axis can shard across 2 TensorCores (v7x)."""
    bn_vmem = max(1, budget_bytes // max(1, P * per_lane_bytes))
    bn_tgt = max(1, target_lanes // P)
    bn = int(min(N, bn_tgt, bn_vmem))
    if bn >= N and N > 1 and ((N + 1) // 2) * P >= 1024:
        bn = (N + 1) // 2
    return max(1, bn)


def default_1d_coupling_function(params, x, *, compute_dtype=jnp.bfloat16,
                                 target_lanes=4096):
    """Forward pass of the module.  x: (N, C, L) -> (N, C, L)."""
    w1, b1 = params["w1"], params["b1"]
    w2, b2 = params["w2"], params["b2"]
    w3, b3 = params["w3"], params["b3"]

    N, Cin, L = x.shape
    H, _, K = w1.shape                      # hidden = w * channels
    Cout = w3.shape[0]
    assert K % 2 == 1
    r = K // 2
    P = L + 2 * r                           # per-segment period (with halo)
    halo = _round_up(max(r, 1), 128)        # aligned leading halo in scratch

    Cin_p = _round_up(Cin, 8)               # sublane padding
    H_p = _round_up(H, 8)

    esz = jnp.dtype(compute_dtype).itemsize
    oesz = jnp.dtype(x.dtype).itemsize
    per_lane = (2 * Cin_p * esz + 2 * Cout * oesz + 2 * H_p * esz
                + K * H_p * esz + 3 * H_p * 4 + Cout * 4)
    Bn = _pick_bn(N, P, per_lane, target_lanes=target_lanes)
    G = -(-N // Bn)
    N_pad = G * Bn
    Wx = Bn * P                             # packed input lane width
    Wout = Wx - 2 * r                       # packed conv-output lane width
    Wbuf = halo + Wout + r                  # scratch lane width

    # ---- wrapper-side layout plumbing (pure XLA) -----------------------------
    # zero "same" padding + lane packing + channel padding happen here, so the
    # kernel sees one lane-dense, already-padded block per step.
    xp = x.astype(compute_dtype)
    xp = jnp.pad(xp, ((0, N_pad - N), (0, Cin_p - Cin), (r, r)))
    xp = xp.reshape(G, Bn, Cin_p, P).transpose(0, 2, 1, 3).reshape(G, Cin_p, Wx)

    def prep_w(w, rows_p, cols_p):
        # (Cout, Cin, K) -> (K, rows_p, cols_p) with zero padding rows/cols
        co, ci, k = w.shape
        wk = jnp.transpose(w, (2, 0, 1))
        wk = jnp.pad(wk, ((0, 0), (0, rows_p - co), (0, cols_p - ci)))
        return wk.astype(compute_dtype)

    w1a = prep_w(w1, H_p, Cin_p)
    w2a = prep_w(w2, H_p, H_p)
    w3a = prep_w(w3, Cout, H_p)
    b1c = jnp.pad(b1, (0, H_p - H)).reshape(H_p, 1).astype(jnp.float32)
    b2c = jnp.pad(b2, (0, H_p - H)).reshape(H_p, 1).astype(jnp.float32)
    b3c = b3.reshape(Cout, 1).astype(jnp.float32)

    # 1.0 on valid output lanes, 0.0 on inter-segment gap lanes (re-applies the
    # zero "same"-padding between layers).
    mask = ((jnp.arange(Wout) % P) < L).astype(jnp.float32)[None, :]

    kernel = functools.partial(_fused_coupling_kernel,
                               K=K, r=r, Wout=Wout, halo=halo)

    # VMEM accounting: double-buffered IO + resident weights + scratch + temps;
    # cap at 48 MiB so v7x (64 MiB physical per TC) keeps compiler headroom.
    tmp_bytes = Wout * (3 * H_p * 4 + K * H_p * esz + Cout * 4)
    io_bytes = 2 * (Cin_p * Wx * esz + Cout * Wout * oesz + Wout * 4
                    + (w1a.size + w2a.size + w3a.size) * esz)
    scratch_bytes = 2 * H_p * Wbuf * esz
    vmem_limit = int(min(48 << 20,
                         max(16 << 20, 2 * (tmp_bytes + io_bytes + scratch_bytes))))

    flops = int(2 * N * L * K * (H * Cin + H * H + Cout * H))
    bytes_accessed = int(xp.size * esz + G * Cout * Wout * oesz
                         + (w1a.size + w2a.size + w3a.size) * esz)

    out = pl.pallas_call(
        kernel,
        out_shape=jax.ShapeDtypeStruct((G, Cout, Wout), x.dtype),
        grid=(G,),
        in_specs=[
            pl.BlockSpec((1, Cin_p, Wx), lambda g: (g, 0, 0)),   # packed input
            pl.BlockSpec((1, Wout), lambda g: (0, 0)),           # gap mask
            pl.BlockSpec(w1a.shape, lambda g: (0, 0, 0)),        # w1 (resident)
            pl.BlockSpec(b1c.shape, lambda g: (0, 0)),           # b1
            pl.BlockSpec(w2a.shape, lambda g: (0, 0, 0)),        # w2
            pl.BlockSpec(b2c.shape, lambda g: (0, 0)),           # b2
            pl.BlockSpec(w3a.shape, lambda g: (0, 0, 0)),        # w3
            pl.BlockSpec(b3c.shape, lambda g: (0, 0)),           # b3
        ],
        out_specs=pl.BlockSpec((1, Cout, Wout), lambda g: (g, 0, 0)),
        scratch_shapes=[
            pltpu.VMEM((H_p, Wbuf), compute_dtype),   # padded hidden 1
            pltpu.VMEM((H_p, Wbuf), compute_dtype),   # padded hidden 2
        ],
        compiler_params=pltpu.CompilerParams(
            dimension_semantics=("parallel",),
            vmem_limit_bytes=vmem_limit),
        cost_estimate=pl.CostEstimate(flops=flops, transcendentals=0,
                                      bytes_accessed=bytes_accessed),
    )(xp, mask, w1a, b1c, w2a, b2c, w3a, b3c)

    # Strip halo/gap lanes and restore (N, Cout, L) -- pure layout on the XLA
    # side (kept out of the kernel so its stores stay lane-dense).
    out = jnp.pad(out, ((0, 0), (0, 0), (0, 2 * r)))
    out = out.reshape(G, Cout, Bn, P)[:, :, :, :L]
    out = out.transpose(0, 2, 1, 3).reshape(N_pad, Cout, L)[:N]
    return out


# ----------------------------------------------------------------------------
# Parameter init (matches module __init__: xavier_uniform weights, zero bias)
# ----------------------------------------------------------------------------
def _xavier_uniform_conv1d(key, cout, cin, k):
    fan_in = cin * k
    fan_out = cout * k
    a = jnp.sqrt(6.0 / (fan_in + fan_out))
    return jax.random.uniform(key, (cout, cin, k), jnp.float32, -a, a)


def init_params(key, channels, kernel_size, w=4):
    hidden = channels * w
    k1, k2, k3 = jax.random.split(key, 3)
    return {
        "w1": _xavier_uniform_conv1d(k1, hidden, channels, kernel_size),
        "b1": jnp.zeros((hidden,), jnp.float32),
        "w2": _xavier_uniform_conv1d(k2, hidden, hidden, kernel_size),
        "b2": jnp.zeros((hidden,), jnp.float32),
        "w3": _xavier_uniform_conv1d(k3, channels, hidden, kernel_size),
        "b3": jnp.zeros((channels,), jnp.float32),
    }


# ----------------------------------------------------------------------------
# Pure-JAX reference (for correctness check)
# ----------------------------------------------------------------------------
def _conv1d_ref(x, w, b, apply_relu):
    y = jax.lax.conv_general_dilated(
        x, w, window_strides=(1,), padding="SAME",
        dimension_numbers=("NCH", "OIH", "NCH"))
    y = y + b[None, :, None]
    if apply_relu:
        y = jnp.maximum(y, 0.0)
    return y


def _forward_ref(params, x):
    h = _conv1d_ref(x, params["w1"], params["b1"], True)
    h = _conv1d_ref(h, params["w2"], params["b2"], True)
    return _conv1d_ref(h, params["w3"], params["b3"], False)


if __name__ == "__main__":
    channels, kernel_size, width = 4, 3, 4
    N, L = 2, 16

    key = jax.random.PRNGKey(0)
    k_param, k_x = jax.random.split(key)
    params = init_params(k_param, channels, kernel_size, w=width)
    x = jax.random.normal(k_x, (N, channels, L), jnp.float32)
    y_ref = _forward_ref(params, x)

    # f32-operand path: tight correctness check.
    y32 = jax.block_until_ready(
        default_1d_coupling_function(params, x, compute_dtype=jnp.float32))
    assert y32.shape == (N, channels, L)
    assert jnp.allclose(y32, y_ref, atol=1e-4, rtol=1e-4), (
        float(jnp.max(jnp.abs(y32 - y_ref))))

    # Default bf16-operand path (f32 accumulation): loose tolerance.
    y = jax.block_until_ready(default_1d_coupling_function(params, x))
    assert y.shape == (N, channels, L)
    assert jnp.allclose(y, y_ref, atol=1e-1, rtol=1e-1), (
        float(jnp.max(jnp.abs(y - y_ref))))

    # Ragged-batch path (N not divisible by Bn -> wrapper batch padding).
    N2, L2 = 3, 8
    x2 = jax.random.normal(jax.random.PRNGKey(1), (N2, channels, L2), jnp.float32)
    y2 = jax.block_until_ready(
        default_1d_coupling_function(params, x2, compute_dtype=jnp.float32,
                                     target_lanes=20))
    y2_ref = _forward_ref(params, x2)
    assert y2.shape == (N2, channels, L2)
    assert jnp.allclose(y2, y2_ref, atol=1e-4, rtol=1e-4), (
        float(jnp.max(jnp.abs(y2 - y2_ref))))

    print("KERNEL_OK")
</pallas_src>

<mosaic_0001>
module attributes {stable_mosaic.version = 11 : i64} {
  func.func @_fused_coupling_kernel(%arg0: i32, %arg1: memref<1x8x36xf32, #tpu.memory_space<vmem>>, %arg2: memref<1x34xf32, #tpu.memory_space<vmem>>, %arg3: memref<3x16x8xf32, #tpu.memory_space<vmem>>, %arg4: memref<16x1xf32, #tpu.memory_space<vmem>>, %arg5: memref<3x16x16xf32, #tpu.memory_space<vmem>>, %arg6: memref<16x1xf32, #tpu.memory_space<vmem>>, %arg7: memref<3x4x16xf32, #tpu.memory_space<vmem>>, %arg8: memref<4x1xf32, #tpu.memory_space<vmem>>, %arg9: memref<1x4x34xf32, #tpu.memory_space<vmem>>, %arg10: memref<16x163xf32, #tpu.memory_space<vmem>>, %arg11: memref<16x163xf32, #tpu.memory_space<vmem>>) attributes {dimension_semantics = [#tpu.dimension_semantics<parallel>], iteration_bounds = array<i64: 1>, scalar_prefetch = 0 : i64, scratch_operands = 2 : i64, tpu.core_type = #tpu.core_type<tc>, window_params = [{transform_indices = @transform_0, window_bounds = array<i64: 1, 8, 36>}, {pipeline_mode = #tpu.pipeline_mode<synchronous>, transform_indices = @transform_1, window_bounds = array<i64: 1, 34>}, {pipeline_mode = #tpu.pipeline_mode<synchronous>, transform_indices = @transform_2, window_bounds = array<i64: 3, 16, 8>}, {pipeline_mode = #tpu.pipeline_mode<synchronous>, transform_indices = @transform_3, window_bounds = array<i64: 16, 1>}, {pipeline_mode = #tpu.pipeline_mode<synchronous>, transform_indices = @transform_4, window_bounds = array<i64: 3, 16, 16>}, {pipeline_mode = #tpu.pipeline_mode<synchronous>, transform_indices = @transform_5, window_bounds = array<i64: 16, 1>}, {pipeline_mode = #tpu.pipeline_mode<synchronous>, transform_indices = @transform_6, window_bounds = array<i64: 3, 4, 16>}, {pipeline_mode = #tpu.pipeline_mode<synchronous>, transform_indices = @transform_7, window_bounds = array<i64: 4, 1>}, {transform_indices = @transform_8, window_bounds = array<i64: 1, 4, 34>}]} {
    %cst = arith.constant 0.000000e+00 : f32
    %0 = vector.broadcast %cst : f32 to vector<16x1xf32>
    %c0 = arith.constant 0 : index
    %c127 = arith.constant 127 : index
    %1 = vector.load %arg10[%c0, %c127] : memref<16x163xf32, #tpu.memory_space<vmem>>, vector<16x1xf32>
    tpu.vector_store %arg10[%c0, %c127], %0 {strides = array<i32>} : memref<16x163xf32, #tpu.memory_space<vmem>>, vector<16x1xf32>,
    %cst_0 = arith.constant 0.000000e+00 : f32
    %2 = vector.broadcast %cst_0 : f32 to vector<16x1xf32>
    %c0_1 = arith.constant 0 : index
    %c162 = arith.constant 162 : index
    %3 = vector.load %arg10[%c0_1, %c162] : memref<16x163xf32, #tpu.memory_space<vmem>>, vector<16x1xf32>
    tpu.vector_store %arg10[%c0_1, %c162], %2 {strides = array<i32>} : memref<16x163xf32, #tpu.memory_space<vmem>>, vector<16x1xf32>,
    %cst_2 = arith.constant 0.000000e+00 : f32
    %4 = vector.broadcast %cst_2 : f32 to vector<16x1xf32>
    %c0_3 = arith.constant 0 : index
    %c127_4 = arith.constant 127 : index
    %5 = vector.load %arg11[%c0_3, %c127_4] : memref<16x163xf32, #tpu.memory_space<vmem>>, vector<16x1xf32>
    tpu.vector_store %arg11[%c0_3, %c127_4], %4 {strides = array<i32>} : memref<16x163xf32, #tpu.memory_space<vmem>>, vector<16x1xf32>,
    %cst_5 = arith.constant 0.000000e+00 : f32
    %6 = vector.broadcast %cst_5 : f32 to vector<16x1xf32>
    %c0_6 = arith.constant 0 : index
    %c162_7 = arith.constant 162 : index
    %7 = vector.load %arg11[%c0_6, %c162_7] : memref<16x163xf32, #tpu.memory_space<vmem>>, vector<16x1xf32>
    tpu.vector_store %arg11[%c0_6, %c162_7], %6 {strides = array<i32>} : memref<16x163xf32, #tpu.memory_space<vmem>>, vector<16x1xf32>,
    %c0_8 = arith.constant 0 : index
    %c0_9 = arith.constant 0 : index
    %8 = vector.load %arg2[%c0_8, %c0_9] : memref<1x34xf32, #tpu.memory_space<vmem>>, vector<1x34xf32>
    %c0_10 = arith.constant 0 : index
    %c0_11 = arith.constant 0 : index
    %c0_12 = arith.constant 0 : index
    %9 = vector.load %arg1[%c0_10, %c0_11, %c0_12] : memref<1x8x36xf32, #tpu.memory_space<vmem>>, vector<1x8x36xf32>
    %10 = vector.shape_cast %9 : vector<1x8x36xf32> to vector<8x36xf32>
    %c0_13 = arith.constant 0 : index
    %c0_14 = arith.constant 0 : index
    %11 = vector.load %arg4[%c0_13, %c0_14] : memref<16x1xf32, #tpu.memory_space<vmem>>, vector<16x1xf32>
    %c0_15 = arith.constant 0 : index
    %c0_16 = arith.constant 0 : index
    %c0_17 = arith.constant 0 : index
    %12 = vector.load %arg3[%c0_15, %c0_16, %c0_17] : memref<3x16x8xf32, #tpu.memory_space<vmem>>, vector<1x16x8xf32>
    %13 = vector.shape_cast %12 : vector<1x16x8xf32> to vector<16x8xf32>
    %14 = vector.extract_strided_slice %10 {offsets = [0, 0], sizes = [8, 34], strides = [1, 1]} : vector<8x36xf32> to vector<8x34xf32>
    %cst_18 = arith.constant dense<0.000000e+00> : vector<16x34xf32>
    %15 = tpu.matmul %13, %14, %cst_18 {dimension_numbers = #tpu.dot_dimension_numbers<[1], [0], [0], [1], [0, 0, 1, 1], [], []>} : vector<16x8xf32>, vector<8x34xf32>, vector<16x34xf32> -> vector<16x34xf32>
    %16 = vector.broadcast %11 : vector<16x1xf32> to vector<16x34xf32>
    %17 = arith.addf %16, %15 : vector<16x34xf32>
    %c1 = arith.constant 1 : index
    %c0_19 = arith.constant 0 : index
    %c0_20 = arith.constant 0 : index
    %18 = vector.load %arg3[%c1, %c0_19, %c0_20] : memref<3x16x8xf32, #tpu.memory_space<vmem>>, vector<1x16x8xf32>
    %19 = vector.shape_cast %18 : vector<1x16x8xf32> to vector<16x8xf32>
    %20 = vector.extract_strided_slice %10 {offsets = [0, 1], sizes = [8, 34], strides = [1, 1]} : vector<8x36xf32> to vector<8x34xf32>
    %cst_21 = arith.constant dense<0.000000e+00> : vector<16x34xf32>
    %21 = tpu.matmul %19, %20, %cst_21 {dimension_numbers = #tpu.dot_dimension_numbers<[1], [0], [0], [1], [0, 0, 1, 1], [], []>} : vector<16x8xf32>, vector<8x34xf32>, vector<16x34xf32> -> vector<16x34xf32>
    %22 = arith.addf %17, %21 : vector<16x34xf32>
    %c2 = arith.constant 2 : index
    %c0_22 = arith.constant 0 : index
    %c0_23 = arith.constant 0 : index
    %23 = vector.load %arg3[%c2, %c0_22, %c0_23] : memref<3x16x8xf32, #tpu.memory_space<vmem>>, vector<1x16x8xf32>
    %24 = vector.shape_cast %23 : vector<1x16x8xf32> to vector<16x8xf32>
    %25 = vector.extract_strided_slice %10 {offsets = [0, 2], sizes = [8, 34], strides = [1, 1]} : vector<8x36xf32> to vector<8x34xf32>
    %cst_24 = arith.constant dense<0.000000e+00> : vector<16x34xf32>
    %26 = tpu.matmul %24, %25, %cst_24 {dimension_numbers = #tpu.dot_dimension_numbers<[1], [0], [0], [1], [0, 0, 1, 1], [], []>} : vector<16x8xf32>, vector<8x34xf32>, vector<16x34xf32> -> vector<16x34xf32>
    %27 = arith.addf %22, %26 : vector<16x34xf32>
    %cst_25 = arith.constant 0.000000e+00 : f32
    %28 = vector.broadcast %cst_25 : f32 to vector<16x34xf32>
    %29 = arith.maximumf %27, %28 : vector<16x34xf32>
    %30 = vector.broadcast %8 : vector<1x34xf32> to vector<16x34xf32>
    %31 = arith.mulf %29, %30 : vector<16x34xf32>
    %c0_26 = arith.constant 0 : index
    %c128 = arith.constant 128 : index
    %32 = vector.load %arg10[%c0_26, %c128] : memref<16x163xf32, #tpu.memory_space<vmem>>, vector<16x34xf32>
    tpu.vector_store %arg10[%c0_26, %c128], %31 {strides = array<i32>} : memref<16x163xf32, #tpu.memory_space<vmem>>, vector<16x34xf32>,
    %c0_27 = arith.constant 0 : index
    %c0_28 = arith.constant 0 : index
    %33 = vector.load %arg6[%c0_27, %c0_28] : memref<16x1xf32, #tpu.memory_space<vmem>>, vector<16x1xf32>
    %c0_29 = arith.constant 0 : index
    %c0_30 = arith.constant 0 : index
    %c0_31 = arith.constant 0 : index
    %34 = vector.load %arg5[%c0_29, %c0_30, %c0_31] : memref<3x16x16xf32, #tpu.memory_space<vmem>>, vector<1x16x16xf32>
    %35 = vector.shape_cast %34 : vector<1x16x16xf32> to vector<16x16xf32>
    %c0_32 = arith.constant 0 : index
    %c127_33 = arith.constant 127 : index
    %36 = vector.load %arg10[%c0_32, %c127_33] : memref<16x163xf32, #tpu.memory_space<vmem>>, vector<16x34xf32>
    %cst_34 = arith.constant dense<0.000000e+00> : vector<16x34xf32>
    %37 = tpu.matmul %35, %36, %cst_34 {dimension_numbers = #tpu.dot_dimension_numbers<[1], [0], [0], [1], [0, 0, 1, 1], [], []>} : vector<16x16xf32>, vector<16x34xf32>, vector<16x34xf32> -> vector<16x34xf32>
    %38 = vector.broadcast %33 : vector<16x1xf32> to vector<16x34xf32>
    %39 = arith.addf %38, %37 : vector<16x34xf32>
    %c1_35 = arith.constant 1 : index
    %c0_36 = arith.constant 0 : index
    %c0_37 = arith.constant 0 : index
    %40 = vector.load %arg5[%c1_35, %c0_36, %c0_37] : memref<3x16x16xf32, #tpu.memory_space<vmem>>, vector<1x16x16xf32>
    %41 = vector.shape_cast %40 : vector<1x16x16xf32> to vector<16x16xf32>
    %c0_38 = arith.constant 0 : index
    %c128_39 = arith.constant 128 : index
    %42 = vector.load %arg10[%c0_38, %c128_39] : memref<16x163xf32, #tpu.memory_space<vmem>>, vector<16x34xf32>
    %cst_40 = arith.constant dense<0.000000e+00> : vector<16x34xf32>
    %43 = tpu.matmul %41, %42, %cst_40 {dimension_numbers = #tpu.dot_dimension_numbers<[1], [0], [0], [1], [0, 0, 1, 1], [], []>} : vector<16x16xf32>, vector<16x34xf32>, vector<16x34xf32> -> vector<16x34xf32>
    %44 = arith.addf %39, %43 : vector<16x34xf32>
    %c2_41 = arith.constant 2 : index
    %c0_42 = arith.constant 0 : index
    %c0_43 = arith.constant 0 : index
    %45 = vector.load %arg5[%c2_41, %c0_42, %c0_43] : memref<3x16x16xf32, #tpu.memory_space<vmem>>, vector<1x16x16xf32>
    %46 = vector.shape_cast %45 : vector<1x16x16xf32> to vector<16x16xf32>
    %c0_44 = arith.constant 0 : index
    %c129 = arith.constant 129 : index
    %47 = vector.load %arg10[%c0_44, %c129] : memref<16x163xf32, #tpu.memory_space<vmem>>, vector<16x34xf32>
    %cst_45 = arith.constant dense<0.000000e+00> : vector<16x34xf32>
    %48 = tpu.matmul %46, %47, %cst_45 {dimension_numbers = #tpu.dot_dimension_numbers<[1], [0], [0], [1], [0, 0, 1, 1], [], []>} : vector<16x16xf32>, vector<16x34xf32>, vector<16x34xf32> -> vector<16x34xf32>
    %49 = arith.addf %44, %48 : vector<16x34xf32>
    %cst_46 = arith.constant 0.000000e+00 : f32
    %50 = vector.broadcast %cst_46 : f32 to vector<16x34xf32>
    %51 = arith.maximumf %49, %50 : vector<16x34xf32>
    %52 = vector.broadcast %8 : vector<1x34xf32> to vector<16x34xf32>
    %53 = arith.mulf %51, %52 : vector<16x34xf32>
    %c0_47 = arith.constant 0 : index
    %c128_48 = arith.constant 128 : index
    %54 = vector.load %arg11[%c0_47, %c128_48] : memref<16x163xf32, #tpu.memory_space<vmem>>, vector<16x34xf32>
    tpu.vector_store %arg11[%c0_47, %c128_48], %53 {strides = array<i32>} : memref<16x163xf32, #tpu.memory_space<vmem>>, vector<16x34xf32>,
    %c0_49 = arith.constant 0 : index
    %c0_50 = arith.constant 0 : index
    %55 = vector.load %arg8[%c0_49, %c0_50] : memref<4x1xf32, #tpu.memory_space<vmem>>, vector<4x1xf32>
    %c0_51 = arith.constant 0 : index
    %c0_52 = arith.constant 0 : index
    %c0_53 = arith.constant 0 : index
    %56 = vector.load %arg7[%c0_51, %c0_52, %c0_53] : memref<3x4x16xf32, #tpu.memory_space<vmem>>, vector<1x4x16xf32>
    %57 = vector.shape_cast %56 : vector<1x4x16xf32> to vector<4x16xf32>
    %c0_54 = arith.constant 0 : index
    %c127_55 = arith.constant 127 : index
    %58 = vector.load %arg11[%c0_54, %c127_55] : memref<16x163xf32, #tpu.memory_space<vmem>>, vector<16x34xf32>
    %cst_56 = arith.constant dense<0.000000e+00> : vector<4x34xf32>
    %59 = tpu.matmul %57, %58, %cst_56 {dimension_numbers = #tpu.dot_dimension_numbers<[1], [0], [0], [1], [0, 0, 1, 1], [], []>} : vector<4x16xf32>, vector<16x34xf32>, vector<4x34xf32> -> vector<4x34xf32>
    %60 = vector.broadcast %55 : vector<4x1xf32> to vector<4x34xf32>
    %61 = arith.addf %60, %59 : vector<4x34xf32>
    %c1_57 = arith.constant 1 : index
    %c0_58 = arith.constant 0 : index
    %c0_59 = arith.constant 0 : index
    %62 = vector.load %arg7[%c1_57, %c0_58, %c0_59] : memref<3x4x16xf32, #tpu.memory_space<vmem>>, vector<1x4x16xf32>
    %63 = vector.shape_cast %62 : vector<1x4x16xf32> to vector<4x16xf32>
    %c0_60 = arith.constant 0 : index
    %c128_61 = arith.constant 128 : index
    %64 = vector.load %arg11[%c0_60, %c128_61] : memref<16x163xf32, #tpu.memory_space<vmem>>, vector<16x34xf32>
    %cst_62 = arith.constant dense<0.000000e+00> : vector<4x34xf32>
    %65 = tpu.matmul %63, %64, %cst_62 {dimension_numbers = #tpu.dot_dimension_numbers<[1], [0], [0], [1], [0, 0, 1, 1], [], []>} : vector<4x16xf32>, vector<16x34xf32>, vector<4x34xf32> -> vector<4x34xf32>
    %66 = arith.addf %61, %65 : vector<4x34xf32>
    %c2_63 = arith.constant 2 : index
    %c0_64 = arith.constant 0 : index
    %c0_65 = arith.constant 0 : index
    %67 = vector.load %arg7[%c2_63, %c0_64, %c0_65] : memref<3x4x16xf32, #tpu.memory_space<vmem>>, vector<1x4x16xf32>
    %68 = vector.shape_cast %67 : vector<1x4x16xf32> to vector<4x16xf32>
    %c0_66 = arith.constant 0 : index
    %c129_67 = arith.constant 129 : index
    %69 = vector.load %arg11[%c0_66, %c129_67] : memref<16x163xf32, #tpu.memory_space<vmem>>, vector<16x34xf32>
    %cst_68 = arith.constant dense<0.000000e+00> : vector<4x34xf32>
    %70 = tpu.matmul %68, %69, %cst_68 {dimension_numbers = #tpu.dot_dimension_numbers<[1], [0], [0], [1], [0, 0, 1, 1], [], []>} : vector<4x16xf32>, vector<16x34xf32>, vector<4x34xf32> -> vector<4x34xf32>
    %71 = arith.addf %66, %70 : vector<4x34xf32>
    %c0_69 = arith.constant 0 : index
    %c0_70 = arith.constant 0 : index
    %c0_71 = arith.constant 0 : index
    %72 = vector.load %arg9[%c0_69, %c0_70, %c0_71] : memref<1x4x34xf32, #tpu.memory_space<vmem>>, vector<1x4x34xf32>
    %73 = vector.shape_cast %72 : vector<1x4x34xf32> to vector<4x34xf32>
    %74 = vector.shape_cast %71 : vector<4x34xf32> to vector<1x4x34xf32>
    tpu.vector_store %arg9[%c0_69, %c0_70, %c0_71], %74 {strides = array<i32>} : memref<1x4x34xf32, #tpu.memory_space<vmem>>, vector<1x4x34xf32>,
    return
  }
  func.func @transform_0(%arg0: i32) -> (i32, i32, i32) {
    %c0_i32 = arith.constant 0 : i32
    %c0_i32_0 = arith.constant 0 : i32
    %c0_i32_1 = arith.constant 0 : i32
    return %arg0, %c0_i32, %c0_i32_0 : i32, i32, i32
  }
  func.func @transform_1(%arg0: i32) -> (i32, i32) {
    %c0_i32 = arith.constant 0 : i32
    %c0_i32_0 = arith.constant 0 : i32
    %c0_i32_1 = arith.constant 0 : i32
    return %c0_i32, %c0_i32_0 : i32, i32
  }
  func.func @transform_2(%arg0: i32) -> (i32, i32, i32) {
    %c0_i32 = arith.constant 0 : i32
    %c0_i32_0 = arith.constant 0 : i32
    %c0_i32_1 = arith.constant 0 : i32
    %c0_i32_2 = arith.constant 0 : i32
    return %c0_i32, %c0_i32_0, %c0_i32_1 : i32, i32, i32
  }
  func.func @transform_3(%arg0: i32) -> (i32, i32) {
    %c0_i32 = arith.constant 0 : i32
    %c0_i32_0 = arith.constant 0 : i32
    %c0_i32_1 = arith.constant 0 : i32
    return %c0_i32, %c0_i32_0 : i32, i32
  }
  func.func @transform_4(%arg0: i32) -> (i32, i32, i32) {
    %c0_i32 = arith.constant 0 : i32
    %c0_i32_0 = arith.constant 0 : i32
    %c0_i32_1 = arith.constant 0 : i32
    %c0_i32_2 = arith.constant 0 : i32
    return %c0_i32, %c0_i32_0, %c0_i32_1 : i32, i32, i32
  }
  func.func @transform_5(%arg0: i32) -> (i32, i32) {
    %c0_i32 = arith.constant 0 : i32
    %c0_i32_0 = arith.constant 0 : i32
    %c0_i32_1 = arith.constant 0 : i32
    return %c0_i32, %c0_i32_0 : i32, i32
  }
  func.func @transform_6(%arg0: i32) -> (i32, i32, i32) {
    %c0_i32 = arith.constant 0 : i32
    %c0_i32_0 = arith.constant 0 : i32
    %c0_i32_1 = arith.constant 0 : i32
    %c0_i32_2 = arith.constant 0 : i32
    return %c0_i32, %c0_i32_0, %c0_i32_1 : i32, i32, i32
  }
  func.func @transform_7(%arg0: i32) -> (i32, i32) {
    %c0_i32 = arith.constant 0 : i32
    %c0_i32_0 = arith.constant 0 : i32
    %c0_i32_1 = arith.constant 0 : i32
    return %c0_i32, %c0_i32_0 : i32, i32
  }
  func.func @transform_8(%arg0: i32) -> (i32, i32, i32) {
    %c0_i32 = arith.constant 0 : i32
    %c0_i32_0 = arith.constant 0 : i32
    %c0_i32_1 = arith.constant 0 : i32
    return %arg0, %c0_i32, %c0_i32_0 : i32, i32, i32
  }
}

</mosaic_0001>

<llo_original>
// kernel: tpu_custom_call.1
$region0: #{tpu_custom_call.1}
  #allocation0 [shape = 'u32[]', space=smem, size = 0x4, offset = 0x4, fixed_abs, tag = 'smem constant byte address 0x4 - core index']
  #allocation1 [shape = 'u32[144,128]{1,0:T(1,128)}', space=vmem, size = 0x12000, scoped, tag = 'internal scratch']
  #allocation2 [shape = 'f32[16,163]{1,0:T(8,128)}', space=vmem, size = 0x4000, scoped, tag = 'scratch operand']
  #allocation3 [shape = 'f32[16,163]{1,0:T(8,128)}', space=vmem, size = 0x4000, scoped, tag = 'scratch operand']
  %s0 = inlined_call_operand.vmem [shape: f32[1,8,36], index: 0, kind: input, shape index: {}]
  %s1 = inlined_call_operand.vmem [shape: f32[1,34], index: 1, kind: input, shape index: {}]
  %s2 = inlined_call_operand.vmem [shape: f32[3,16,8], index: 2, kind: input, shape index: {}]
  %s3 = inlined_call_operand.vmem [shape: f32[16,1], index: 3, kind: input, shape index: {}]
  %s4 = inlined_call_operand.vmem [shape: f32[3,16,16], index: 4, kind: input, shape index: {}]
  %s5 = inlined_call_operand.vmem [shape: f32[16,1], index: 5, kind: input, shape index: {}]
  %s6 = inlined_call_operand.vmem [shape: f32[3,4,16], index: 6, kind: input, shape index: {}]
  %s7 = inlined_call_operand.vmem [shape: f32[4,1], index: 7, kind: input, shape index: {}]
  %s8 = inlined_call_operand.hbm [shape: f32[1,4,34], index: 8, kind: output, shape index: {}]
  %s9 = sld [smem:[#allocation0]]
  $region42: #{tpu_custom_call.1} parent=0
    _
  %s11 = ssub.s32 1, %s9
  %s12 = scalar_select 0, %s11, %s9
  $region1: #{tpu_custom_call.1} parent=0
    #allocation4 [shape = 'u8[2048]{0}', space=vmem, size = 0x800, scoped, tag = 'output window, operand 0, single buffered']
    #allocation5 [shape = 's32[1]{0}', space=sflag, size = 0x4, scoped, tag = 'scoped memory for tpu_custom_call.1']
    %13 = vsyncpa [#allocation5], 0
    // Predicated region
    $region2: #{tpu_custom_call.1} parent=1 // pred_check
      _
    $region3: #{tpu_custom_call.1} parent=1 // pred_check_branch
      %15 = sbr.rel (0) target = $region5
    $region4: #{tpu_custom_call.1} parent=1 // pred_region
      _
    $region5: #{tpu_custom_call.1} parent=1 // pred_fallthru
      _
    // Predicated region
    $region6: #{tpu_custom_call.1} parent=1 // pred_check
      _
    $region7: #{tpu_custom_call.1} parent=1 // pred_check_branch
      %17 = sbr.rel (0) target = $region9
    $region8: #{tpu_custom_call.1} parent=1 // pred_region
      _
    $region9: #{tpu_custom_call.1} parent=1 // pred_fallthru
      _
    // Predicated region
    $region10: #{tpu_custom_call.1} parent=1 // pred_check
      _
    $region11: #{tpu_custom_call.1} parent=1 // pred_check_branch
      %19 = sbr.rel (0) target = $region13
    $region12: #{tpu_custom_call.1} parent=1 // pred_region
      _
    $region13: #{tpu_custom_call.1} parent=1 // pred_fallthru
      _
    // Predicated region
    $region14: #{tpu_custom_call.1} parent=1 // pred_check
      _
    $region15: #{tpu_custom_call.1} parent=1 // pred_check_branch
      %21 = sbr.rel (0) target = $region17
    $region16: #{tpu_custom_call.1} parent=1 // pred_region
      _
    $region17: #{tpu_custom_call.1} parent=1 // pred_fallthru
      _
    // Predicated region
    $region18: #{tpu_custom_call.1} parent=1 // pred_check
      _
    $region19: #{tpu_custom_call.1} parent=1 // pred_check_branch
      %23 = sbr.rel (0) target = $region21
    $region20: #{tpu_custom_call.1} parent=1 // pred_region
      _
    $region21: #{tpu_custom_call.1} parent=1 // pred_fallthru
      _
    // Predicated region
    $region22: #{tpu_custom_call.1} parent=1 // pred_check
      _
    $region23: #{tpu_custom_call.1} parent=1 // pred_check_branch
      %25 = sbr.rel (0) target = $region25
    $region24: #{tpu_custom_call.1} parent=1 // pred_region
      _
    $region25: #{tpu_custom_call.1} parent=1 // pred_fallthru
      _
    // Predicated region
    $region26: #{tpu_custom_call.1} parent=1 // pred_check
      _
    $region27: #{tpu_custom_call.1} parent=1 // pred_check_branch
      %27 = sbr.rel (0) target = $region29
    $region28: #{tpu_custom_call.1} parent=1 // pred_region
      _
    $region29: #{tpu_custom_call.1} parent=1 // pred_fallthru
      _
    // Predicated region
    $region30: #{tpu_custom_call.1} parent=1 // pred_check
      _
    $region31: #{tpu_custom_call.1} parent=1 // pred_check_branch
      %29 = sbr.rel (0) target = $region33
    $region32: #{tpu_custom_call.1} parent=1 // pred_region
      _
    $region33: #{tpu_custom_call.1} parent=1 // pred_fallthru
      _
    %vm30 = vcmask 1048568
    %31 = vst.msk [vmem:[#allocation2] sm:$0xff] %vm30, 0.0
    %32 = vst.msk [vmem:[#allocation2 + $0x10] sm:$0xff] %vm30, 0.0
    %vm33 = vcmask 285968
    %34 = vst.msk [vmem:[#allocation2 + $0x8] sm:$0xff] %vm33, 0.0
    %35 = vst.msk [vmem:[#allocation2 + $0x18] sm:$0xff] %vm33, 0.0
    %36 = vst.msk [vmem:[#allocation3] sm:$0xff] %vm30, 0.0
    %37 = vst.msk [vmem:[#allocation3 + $0x10] sm:$0xff] %vm30, 0.0
    %38 = vst.msk [vmem:[#allocation3 + $0x8] sm:$0xff] %vm33, 0.0
    %39 = vst.msk [vmem:[#allocation3 + $0x18] sm:$0xff] %vm33, 0.0
    %v40 = vld [vmem:[%s1] sm:$0x1]
    %v41 = vld [vmem:[%s0] sm:$0xff]
    %v42 = vld [vmem:[%s3] sm:$0xff]
    %v43 = vld [vmem:[%s3 + $0x8] sm:$0xff]
    %v44 = vld [vmem:[%s2] sm:$0xff]
    %v45 = vld [vmem:[%s2 + $0x8] sm:$0xff]
    %vm46 = vcmask 64512
    %v48 = vsel %vm46, %v44, 0
    %v51 = vsel %vm46, %v45, 0
    %53 = vmatprep.subr.mxu0 0.0
    %54 = vmatpush1.msra.mxu0 0.0
    %55 = vmatprep.subr.mxu0 0.0
    %56 = vmatpush1.msra.mxu0 0.0
    %57 = vmatprep.subr.mxu0 0.0
    %58 = vmatpush1.msra.mxu0 0.0
    %59 = vmatprep.subr.mxu0 0.0
    %60 = vmatpush1.msra.mxu0 0.0
    %61 = vmatprep.subr.mxu0 0.0
    %62 = vmatpush1.msra.mxu0 0.0
    %63 = vmatprep.subr.mxu0 0.0
    %64 = vmatpush1.msra.mxu0 0.0
    %65 = vmatprep.subr.mxu0 0.0
    %66 = vmatpush1.msra.mxu0 0.0
    %67 = vmatprep.subr.mxu0 0.0
    %68 = vmatpush1.msra.mxu0 0.0
    %69 = vmatprep.subr.mxu0 0.0
    %70 = vmatpush1.msra.mxu0 0.0
    %71 = vmatprep.subr.mxu0 0.0
    %72 = vmatpush1.msra.mxu0 0.0
    %73 = vmatprep.subr.mxu0 0.0
    %74 = vmatpush1.msra.mxu0 0.0
    %75 = vmatprep.subr.mxu0 0.0
    %76 = vmatpush1.msra.mxu0 0.0
    %77 = vmatprep.subr.mxu0 0.0
    %78 = vmatpush1.msra.mxu0 0.0
    %79 = vmatprep.subr.mxu0 0.0
    %80 = vmatpush1.msra.mxu0 0.0
    %81 = vmatprep.subr.mxu0 0.0
    %82 = vmatpush1.msra.mxu0 0.0
    %83 = vmatprep.subr.mxu0 0.0
    %84 = vmatpush1.msra.mxu0 %v41
    %85 = vmatprep.subr.mxu0 0.0
    %86 = vmatpush2.msra.mxu0 0.0
    %87 = vmatprep.subr.mxu0 0.0
    %88 = vmatpush2.msra.mxu0 0.0
    %89 = vmatprep.subr.mxu0 0.0
    %90 = vmatpush2.msra.mxu0 0.0
    %91 = vmatprep.subr.mxu0 0.0
    %92 = vmatpush2.msra.mxu0 0.0
    %93 = vmatprep.subr.mxu0 0.0
    %94 = vmatpush2.msra.mxu0 0.0
    %95 = vmatprep.subr.mxu0 0.0
    %96 = vmatpush2.msra.mxu0 0.0
    %97 = vmatprep.subr.mxu0 0.0
    %98 = vmatpush2.msra.mxu0 0.0
    %99 = vmatprep.subr.mxu0 0.0
    %100 = vmatpush2.msra.mxu0 0.0
    %101 = vmatprep.subr.mxu0 0.0
    %102 = vmatpush2.msra.mxu0 0.0
    %103 = vmatprep.subr.mxu0 0.0
    %104 = vmatpush2.msra.mxu0 0.0
    %105 = vmatprep.subr.mxu0 0.0
    %106 = vmatpush2.msra.mxu0 0.0
    %107 = vmatprep.subr.mxu0 0.0
    %108 = vmatpush2.msra.mxu0 0.0
    %109 = vmatprep.subr.mxu0 0.0
    %110 = vmatpush2.msra.mxu0 0.0
    %111 = vmatprep.subr.mxu0 0.0
    %112 = vmatpush2.msra.mxu0 0.0
    %113 = vmatprep.subr.mxu0 0.0
    %114 = vmatpush2.msra.mxu0 0.0
    %115 = vmatprep.subr.mxu0 0.0
    %116 = vmatpush2.msra.mxu0 0.0
    %117 = vmatprep.mubr.f32.mxu0 0.0
    %118 = vmatmul.mubr.f32.gmra.mxu0 %v48
    %v119 = vpop.f32.mrf.mxu0
    %v120 = vadd.f32 0.0, %v119
    %v121 = vpop.f32.mrf.mxu0
    %122 = vmatprep.mubr.f32.mxu0 0.0
    %123 = vmatmul.mubr.f32.gmra.mxu0 %v51
    %v124 = vpop.f32.mrf.mxu0
    %v125 = vadd.f32 0.0, %v124
    %v126 = vpop.f32.mrf.mxu0
    %127 = vdwg.mxu0
    %129 = vset.pattern.permute.xlu0 0
    %130 = vperm.xlu0 %129, %v42
    %v131 = vpop.permute.xlu0 %130
    %134 = vset.pattern.permute.xlu0 0
    %135 = vperm.xlu0 %134, %v43
    %v136 = vpop.permute.xlu0 %135
    %v138 = vadd.f32 %v131, %v120
    %v139 = vadd.f32 %v136, %v125
    %s140 = scalar_lea.vmem %s2, 16
    %v141 = vld [vmem:[%s140] sm:$0xff]
    %v142 = vld [vmem:[%s140 + $0x8] sm:$0xff]
    %144 = vrot.lane.b32.xlu0 %v41, 127
    %v145 = vpop.permute.xlu0 %144
    %v148 = vsel %vm46, %v141, 0
    %v151 = vsel %vm46, %v142, 0
    %153 = vmatprep.subr.mxu0 0.0
    %154 = vmatpush1.msra.mxu0 0.0
    %155 = vmatprep.subr.mxu0 0.0
    %156 = vmatpush1.msra.mxu0 0.0
    %157 = vmatprep.subr.mxu0 0.0
    %158 = vmatpush1.msra.mxu0 0.0
    %159 = vmatprep.subr.mxu0 0.0
    %160 = vmatpush1.msra.mxu0 0.0
    %161 = vmatprep.subr.mxu0 0.0
    %162 = vmatpush1.msra.mxu0 0.0
    %163 = vmatprep.subr.mxu0 0.0
    %164 = vmatpush1.msra.mxu0 0.0
    %165 = vmatprep.subr.mxu0 0.0
    %166 = vmatpush1.msra.mxu0 0.0
    %167 = vmatprep.subr.mxu0 0.0
    %168 = vmatpush1.msra.mxu0 0.0
    %169 = vmatprep.subr.mxu0 0.0
    %170 = vmatpush1.msra.mxu0 0.0
    %171 = vmatprep.subr.mxu0 0.0
    %172 = vmatpush1.msra.mxu0 0.0
    %173 = vmatprep.subr.mxu0 0.0
    %174 = vmatpush1.msra.mxu0 0.0
    %175 = vmatprep.subr.mxu0 0.0
    %176 = vmatpush1.msra.mxu0 0.0
    %177 = vmatprep.subr.mxu0 0.0
    %178 = vmatpush1.msra.mxu0 0.0
    %179 = vmatprep.subr.mxu0 0.0
    %180 = vmatpush1.msra.mxu0 0.0
    %181 = vmatprep.subr.mxu0 0.0
    %182 = vmatpush1.msra.mxu0 0.0
    %183 = vmatprep.subr.mxu0 0.0
    %184 = vmatpush1.msra.mxu0 %v145
    %185 = vmatprep.subr.mxu0 0.0
    %186 = vmatpush2.msra.mxu0 0.0
    %187 = vmatprep.subr.mxu0 0.0
    %188 = vmatpush2.msra.mxu0 0.0
    %189 = vmatprep.subr.mxu0 0.0
    %190 = vmatpush2.msra.mxu0 0.0
    %191 = vmatprep.subr.mxu0 0.0
    %192 = vmatpush2.msra.mxu0 0.0
    %193 = vmatprep.subr.mxu0 0.0
    %194 = vmatpush2.msra.mxu0 0.0
    %195 = vmatprep.subr.mxu0 0.0
    %196 = vmatpush2.msra.mxu0 0.0
    %197 = vmatprep.subr.mxu0 0.0
    %198 = vmatpush2.msra.mxu0 0.0
    %199 = vmatprep.subr.mxu0 0.0
    %200 = vmatpush2.msra.mxu0 0.0
    %201 = vmatprep.subr.mxu0 0.0
    %202 = vmatpush2.msra.mxu0 0.0
    %203 = vmatprep.subr.mxu0 0.0
    %204 = vmatpush2.msra.mxu0 0.0
    %205 = vmatprep.subr.mxu0 0.0
    %206 = vmatpush2.msra.mxu0 0.0
    %207 = vmatprep.subr.mxu0 0.0
    %208 = vmatpush2.msra.mxu0 0.0
    %209 = vmatprep.subr.mxu0 0.0
    %210 = vmatpush2.msra.mxu0 0.0
    %211 = vmatprep.subr.mxu0 0.0
    %212 = vmatpush2.msra.mxu0 0.0
    %213 = vmatprep.subr.mxu0 0.0
    %214 = vmatpush2.msra.mxu0 0.0
    %215 = vmatprep.subr.mxu0 0.0
    %216 = vmatpush2.msra.mxu0 0.0
    %217 = vmatprep.mubr.f32.mxu0 0.0
    %218 = vmatmul.mubr.f32.gmra.mxu0 %v148
    %v219 = vpop.f32.mrf.mxu0
    %v220 = vadd.f32 0.0, %v219
    %v221 = vpop.f32.mrf.mxu0
    %222 = vmatprep.mubr.f32.mxu0 0.0
    %223 = vmatmul.mubr.f32.gmra.mxu0 %v151
    %v224 = vpop.f32.mrf.mxu0
    %v225 = vadd.f32 0.0, %v224
    %v226 = vpop.f32.mrf.mxu0
    %227 = vdwg.mxu0
    %v228 = vadd.f32 %v138, %v220
    %v229 = vadd.f32 %v139, %v225
    %s230 = scalar_lea.vmem %s2, 32
    %v231 = vld [vmem:[%s230] sm:$0xff]
    %v232 = vld [vmem:[%s230 + $0x8] sm:$0xff]
    %233 = vrot.lane.b32.xlu0 %v41, 126
    %v234 = vpop.permute.xlu0 %233
    %v237 = vsel %vm46, %v231, 0
    %v240 = vsel %vm46, %v232, 0
    %242 = vmatprep.subr.mxu0 0.0
    %243 = vmatpush1.msra.mxu0 0.0
    %244 = vmatprep.subr.mxu0 0.0
    %245 = vmatpush1.msra.mxu0 0.0
    %246 = vmatprep.subr.mxu0 0.0
    %247 = vmatpush1.msra.mxu0 0.0
    %248 = vmatprep.subr.mxu0 0.0
    %249 = vmatpush1.msra.mxu0 0.0
    %250 = vmatprep.subr.mxu0 0.0
    %251 = vmatpush1.msra.mxu0 0.0
    %252 = vmatprep.subr.mxu0 0.0
    %253 = vmatpush1.msra.mxu0 0.0
    %254 = vmatprep.subr.mxu0 0.0
    %255 = vmatpush1.msra.mxu0 0.0
    %256 = vmatprep.subr.mxu0 0.0
    %257 = vmatpush1.msra.mxu0 0.0
    %258 = vmatprep.subr.mxu0 0.0
    %259 = vmatpush1.msra.mxu0 0.0
    %260 = vmatprep.subr.mxu0 0.0
    %261 = vmatpush1.msra.mxu0 0.0
    %262 = vmatprep.subr.mxu0 0.0
    %263 = vmatpush1.msra.mxu0 0.0
    %264 = vmatprep.subr.mxu0 0.0
    %265 = vmatpush1.msra.mxu0 0.0
    %266 = vmatprep.subr.mxu0 0.0
    %267 = vmatpush1.msra.mxu0 0.0
    %268 = vmatprep.subr.mxu0 0.0
    %269 = vmatpush1.msra.mxu0 0.0
    %270 = vmatprep.subr.mxu0 0.0
    %271 = vmatpush1.msra.mxu0 0.0
    %272 = vmatprep.subr.mxu0 0.0
    %273 = vmatpush1.msra.mxu0 %v234
    %274 = vmatprep.subr.mxu0 0.0
    %275 = vmatpush2.msra.mxu0 0.0
    %276 = vmatprep.subr.mxu0 0.0
    %277 = vmatpush2.msra.mxu0 0.0
    %278 = vmatprep.subr.mxu0 0.0
    %279 = vmatpush2.msra.mxu0 0.0
    %280 = vmatprep.subr.mxu0 0.0
    %281 = vmatpush2.msra.mxu0 0.0
    %282 = vmatprep.subr.mxu0 0.0
    %283 = vmatpush2.msra.mxu0 0.0
    %284 = vmatprep.subr.mxu0 0.0
    %285 = vmatpush2.msra.mxu0 0.0
    %286 = vmatprep.subr.mxu0 0.0
    %287 = vmatpush2.msra.mxu0 0.0
    %288 = vmatprep.subr.mxu0 0.0
    %289 = vmatpush2.msra.mxu0 0.0
    %290 = vmatprep.subr.mxu0 0.0
    %291 = vmatpush2.msra.mxu0 0.0
    %292 = vmatprep.subr.mxu0 0.0
    %293 = vmatpush2.msra.mxu0 0.0
    %294 = vmatprep.subr.mxu0 0.0
    %295 = vmatpush2.msra.mxu0 0.0
    %296 = vmatprep.subr.mxu0 0.0
    %297 = vmatpush2.msra.mxu0 0.0
    %298 = vmatprep.subr.mxu0 0.0
    %299 = vmatpush2.msra.mxu0 0.0
    %300 = vmatprep.subr.mxu0 0.0
    %301 = vmatpush2.msra.mxu0 0.0
    %302 = vmatprep.subr.mxu0 0.0
    %303 = vmatpush2.msra.mxu0 0.0
    %304 = vmatprep.subr.mxu0 0.0
    %305 = vmatpush2.msra.mxu0 0.0
    %306 = vmatprep.mubr.f32.mxu0 0.0
    %307 = vmatmul.mubr.f32.gmra.mxu0 %v237
    %v308 = vpop.f32.mrf.mxu0
    %v309 = vadd.f32 0.0, %v308
    %v310 = vpop.f32.mrf.mxu0
    %311 = vmatprep.mubr.f32.mxu0 0.0
    %312 = vmatmul.mubr.f32.gmra.mxu0 %v240
    %v313 = vpop.f32.mrf.mxu0
    %v314 = vadd.f32 0.0, %v313
    %v315 = vpop.f32.mrf.mxu0
    %316 = vdwg.mxu0
    %v317 = vadd.f32 %v228, %v309
    %v318 = vadd.f32 %v229, %v314
    %v319 = vmax.f32 %v317, 0.0
    %v320 = vmax.f32 %v318, 0.0
    %v322 = vlaneseq
    %v323 = vshrl.u32 %v322, 7
    %v324 = vsub.s32 0, %v323
    %v325 = vrot.slane %v40, %v324
    %v327 = vmul.f32 %v319, %v325
    %v328 = vmul.f32 %v320, %v325
    %vm329 = vcmask 277504
    %330 = vst.msk [vmem:[#allocation2 + $0x8] sm:$0xff] %vm329, %v327
    %331 = vst.msk [vmem:[#allocation2 + $0x18] sm:$0xff] %vm329, %v328
    %v332 = vld [vmem:[%s5] sm:$0xff]
    %v333 = vld [vmem:[%s5 + $0x8] sm:$0xff]
    %v334 = vld [vmem:[%s4] sm:$0xff]
    %v335 = vld [vmem:[%s4 + $0x8] sm:$0xff]
    %v336 = vld [vmem:[#allocation2] sm:$0xff]
    %v337 = vld [vmem:[#allocation2 + $0x8] sm:$0xff]
    %v338 = vld [vmem:[#allocation2 + $0x10] sm:$0xff]
    %v339 = vld [vmem:[#allocation2 + $0x18] sm:$0xff]
    %344 = vrot.lane.b32.xlu0 %v336, 1
    %v345 = vpop.permute.xlu0 %344
    %346 = vrot.lane.b32.xlu0 %v337, 1
    %v347 = vpop.permute.xlu0 %346
    %348 = vrot.lane.b32.xlu0 %v338, 1
    %v349 = vpop.permute.xlu0 %348
    %350 = vrot.lane.b32.xlu0 %v339, 1
    %v351 = vpop.permute.xlu0 %350
    %vm352 = vcmask 7168
    %v353 = vsel %vm352, %v345, %v347
    %v354 = vsel %vm352, %v349, %v351
    %vm357 = vcmask 130048
    %v359 = vsel %vm357, %v334, 0
    %v362 = vsel %vm357, %v335, 0
    %364 = vmatprep.subr.mxu0 0.0
    %365 = vmatpush1.msra.mxu0 0.0
    %366 = vmatprep.subr.mxu0 0.0
    %367 = vmatpush1.msra.mxu0 0.0
    %368 = vmatprep.subr.mxu0 0.0
    %369 = vmatpush1.msra.mxu0 0.0
    %370 = vmatprep.subr.mxu0 0.0
    %371 = vmatpush1.msra.mxu0 0.0
    %372 = vmatprep.subr.mxu0 0.0
    %373 = vmatpush1.msra.mxu0 0.0
    %374 = vmatprep.subr.mxu0 0.0
    %375 = vmatpush1.msra.mxu0 0.0
    %376 = vmatprep.subr.mxu0 0.0
    %377 = vmatpush1.msra.mxu0 0.0
    %378 = vmatprep.subr.mxu0 0.0
    %379 = vmatpush1.msra.mxu0 0.0
    %380 = vmatprep.subr.mxu0 0.0
    %381 = vmatpush1.msra.mxu0 0.0
    %382 = vmatprep.subr.mxu0 0.0
    %383 = vmatpush1.msra.mxu0 0.0
    %384 = vmatprep.subr.mxu0 0.0
    %385 = vmatpush1.msra.mxu0 0.0
    %386 = vmatprep.subr.mxu0 0.0
    %387 = vmatpush1.msra.mxu0 0.0
    %388 = vmatprep.subr.mxu0 0.0
    %389 = vmatpush1.msra.mxu0 0.0
    %390 = vmatprep.subr.mxu0 0.0
    %391 = vmatpush1.msra.mxu0 0.0
    %392 = vmatprep.subr.mxu0 0.0
    %393 = vmatpush1.msra.mxu0 %v354
    %394 = vmatprep.subr.mxu0 0.0
    %395 = vmatpush1.msra.mxu0 %v353
    %396 = vmatprep.subr.mxu0 0.0
    %397 = vmatpush2.msra.mxu0 0.0
    %398 = vmatprep.subr.mxu0 0.0
    %399 = vmatpush2.msra.mxu0 0.0
    %400 = vmatprep.subr.mxu0 0.0
    %401 = vmatpush2.msra.mxu0 0.0
    %402 = vmatprep.subr.mxu0 0.0
    %403 = vmatpush2.msra.mxu0 0.0
    %404 = vmatprep.subr.mxu0 0.0
    %405 = vmatpush2.msra.mxu0 0.0
    %406 = vmatprep.subr.mxu0 0.0
    %407 = vmatpush2.msra.mxu0 0.0
    %408 = vmatprep.subr.mxu0 0.0
    %409 = vmatpush2.msra.mxu0 0.0
    %410 = vmatprep.subr.mxu0 0.0
    %411 = vmatpush2.msra.mxu0 0.0
    %412 = vmatprep.subr.mxu0 0.0
    %413 = vmatpush2.msra.mxu0 0.0
    %414 = vmatprep.subr.mxu0 0.0
    %415 = vmatpush2.msra.mxu0 0.0
    %416 = vmatprep.subr.mxu0 0.0
    %417 = vmatpush2.msra.mxu0 0.0
    %418 = vmatprep.subr.mxu0 0.0
    %419 = vmatpush2.msra.mxu0 0.0
    %420 = vmatprep.subr.mxu0 0.0
    %421 = vmatpush2.msra.mxu0 0.0
    %422 = vmatprep.subr.mxu0 0.0
    %423 = vmatpush2.msra.mxu0 0.0
    %424 = vmatprep.subr.mxu0 0.0
    %425 = vmatpush2.msra.mxu0 0.0
    %426 = vmatprep.subr.mxu0 0.0
    %427 = vmatpush2.msra.mxu0 0.0
    %428 = vmatprep.mubr.f32.mxu0 0.0
    %429 = vmatmul.mubr.f32.gmra.mxu0 %v359
    %v430 = vpop.f32.mrf.mxu0
    %v431 = vadd.f32 0.0, %v430
    %v432 = vpop.f32.mrf.mxu0
    %433 = vmatprep.mubr.f32.mxu0 0.0
    %434 = vmatmul.mubr.f32.gmra.mxu0 %v362
    %v435 = vpop.f32.mrf.mxu0
    %v436 = vadd.f32 0.0, %v435
    %v437 = vpop.f32.mrf.mxu0
    %438 = vdwg.mxu0
    %440 = vset.pattern.permute.xlu0 0
    %441 = vperm.xlu0 %440, %v332
    %v442 = vpop.permute.xlu0 %441
    %445 = vset.pattern.permute.xlu0 0
    %446 = vperm.xlu0 %445, %v333
    %v447 = vpop.permute.xlu0 %446
    %v449 = vadd.f32 %v442, %v431
    %v450 = vadd.f32 %v447, %v436
    %s451 = scalar_lea.vmem %s4, 16
    %v452 = vld [vmem:[%s451] sm:$0xff]
    %v453 = vld [vmem:[%s451 + $0x8] sm:$0xff]
    %v455 = vsel %vm357, %v452, 0
    %v458 = vsel %vm357, %v453, 0
    %460 = vmatprep.subr.mxu0 0.0
    %461 = vmatpush1.msra.mxu0 0.0
    %462 = vmatprep.subr.mxu0 0.0
    %463 = vmatpush1.msra.mxu0 0.0
    %464 = vmatprep.subr.mxu0 0.0
    %465 = vmatpush1.msra.mxu0 0.0
    %466 = vmatprep.subr.mxu0 0.0
    %467 = vmatpush1.msra.mxu0 0.0
    %468 = vmatprep.subr.mxu0 0.0
    %469 = vmatpush1.msra.mxu0 0.0
    %470 = vmatprep.subr.mxu0 0.0
    %471 = vmatpush1.msra.mxu0 0.0
    %472 = vmatprep.subr.mxu0 0.0
    %473 = vmatpush1.msra.mxu0 0.0
    %474 = vmatprep.subr.mxu0 0.0
    %475 = vmatpush1.msra.mxu0 0.0
    %476 = vmatprep.subr.mxu0 0.0
    %477 = vmatpush1.msra.mxu0 0.0
    %478 = vmatprep.subr.mxu0 0.0
    %479 = vmatpush1.msra.mxu0 0.0
    %480 = vmatprep.subr.mxu0 0.0
    %481 = vmatpush1.msra.mxu0 0.0
    %482 = vmatprep.subr.mxu0 0.0
    %483 = vmatpush1.msra.mxu0 0.0
    %484 = vmatprep.subr.mxu0 0.0
    %485 = vmatpush1.msra.mxu0 0.0
    %486 = vmatprep.subr.mxu0 0.0
    %487 = vmatpush1.msra.mxu0 0.0
    %488 = vmatprep.subr.mxu0 0.0
    %489 = vmatpush1.msra.mxu0 %v339
    %490 = vmatprep.subr.mxu0 0.0
    %491 = vmatpush1.msra.mxu0 %v337
    %492 = vmatprep.subr.mxu0 0.0
    %493 = vmatpush2.msra.mxu0 0.0
    %494 = vmatprep.subr.mxu0 0.0
    %495 = vmatpush2.msra.mxu0 0.0
    %496 = vmatprep.subr.mxu0 0.0
    %497 = vmatpush2.msra.mxu0 0.0
    %498 = vmatprep.subr.mxu0 0.0
    %499 = vmatpush2.msra.mxu0 0.0
    %500 = vmatprep.subr.mxu0 0.0
    %501 = vmatpush2.msra.mxu0 0.0
    %502 = vmatprep.subr.mxu0 0.0
    %503 = vmatpush2.msra.mxu0 0.0
    %504 = vmatprep.subr.mxu0 0.0
    %505 = vmatpush2.msra.mxu0 0.0
    %506 = vmatprep.subr.mxu0 0.0
    %507 = vmatpush2.msra.mxu0 0.0
    %508 = vmatprep.subr.mxu0 0.0
    %509 = vmatpush2.msra.mxu0 0.0
    %510 = vmatprep.subr.mxu0 0.0
    %511 = vmatpush2.msra.mxu0 0.0
    %512 = vmatprep.subr.mxu0 0.0
    %513 = vmatpush2.msra.mxu0 0.0
    %514 = vmatprep.subr.mxu0 0.0
    %515 = vmatpush2.msra.mxu0 0.0
    %516 = vmatprep.subr.mxu0 0.0
    %517 = vmatpush2.msra.mxu0 0.0
    %518 = vmatprep.subr.mxu0 0.0
    %519 = vmatpush2.msra.mxu0 0.0
    %520 = vmatprep.subr.mxu0 0.0
    %521 = vmatpush2.msra.mxu0 0.0
    %522 = vmatprep.subr.mxu0 0.0
    %523 = vmatpush2.msra.mxu0 0.0
    %524 = vmatprep.mubr.f32.mxu0 0.0
    %525 = vmatmul.mubr.f32.gmra.mxu0 %v455
    %v526 = vpop.f32.mrf.mxu0
    %v527 = vadd.f32 0.0, %v526
    %v528 = vpop.f32.mrf.mxu0
    %529 = vmatprep.mubr.f32.mxu0 0.0
    %530 = vmatmul.mubr.f32.gmra.mxu0 %v458
    %v531 = vpop.f32.mrf.mxu0
    %v532 = vadd.f32 0.0, %v531
    %v533 = vpop.f32.mrf.mxu0
    %534 = vdwg.mxu0
    %v535 = vadd.f32 %v449, %v527
    %v536 = vadd.f32 %v450, %v532
    %s537 = scalar_lea.vmem %s4, 32
    %v538 = vld [vmem:[%s537] sm:$0xff]
    %v539 = vld [vmem:[%s537 + $0x8] sm:$0xff]
    %540 = vrot.lane.b32.xlu0 %v337, 127
    %v541 = vpop.permute.xlu0 %540
    %542 = vrot.lane.b32.xlu0 %v339, 127
    %v543 = vpop.permute.xlu0 %542
    %v547 = vsel %vm357, %v538, 0
    %v550 = vsel %vm357, %v539, 0
    %552 = vmatprep.subr.mxu0 0.0
    %553 = vmatpush1.msra.mxu0 0.0
    %554 = vmatprep.subr.mxu0 0.0
    %555 = vmatpush1.msra.mxu0 0.0
    %556 = vmatprep.subr.mxu0 0.0
    %557 = vmatpush1.msra.mxu0 0.0
    %558 = vmatprep.subr.mxu0 0.0
    %559 = vmatpush1.msra.mxu0 0.0
    %560 = vmatprep.subr.mxu0 0.0
    %561 = vmatpush1.msra.mxu0 0.0
    %562 = vmatprep.subr.mxu0 0.0
    %563 = vmatpush1.msra.mxu0 0.0
    %564 = vmatprep.subr.mxu0 0.0
    %565 = vmatpush1.msra.mxu0 0.0
    %566 = vmatprep.subr.mxu0 0.0
    %567 = vmatpush1.msra.mxu0 0.0
    %568 = vmatprep.subr.mxu0 0.0
    %569 = vmatpush1.msra.mxu0 0.0
    %570 = vmatprep.subr.mxu0 0.0
    %571 = vmatpush1.msra.mxu0 0.0
    %572 = vmatprep.subr.mxu0 0.0
    %573 = vmatpush1.msra.mxu0 0.0
    %574 = vmatprep.subr.mxu0 0.0
    %575 = vmatpush1.msra.mxu0 0.0
    %576 = vmatprep.subr.mxu0 0.0
    %577 = vmatpush1.msra.mxu0 0.0
    %578 = vmatprep.subr.mxu0 0.0
    %579 = vmatpush1.msra.mxu0 0.0
    %580 = vmatprep.subr.mxu0 0.0
    %581 = vmatpush1.msra.mxu0 %v543
    %582 = vmatprep.subr.mxu0 0.0
    %583 = vmatpush1.msra.mxu0 %v541
    %584 = vmatprep.subr.mxu0 0.0
    %585 = vmatpush2.msra.mxu0 0.0
    %586 = vmatprep.subr.mxu0 0.0
    %587 = vmatpush2.msra.mxu0 0.0
    %588 = vmatprep.subr.mxu0 0.0
    %589 = vmatpush2.msra.mxu0 0.0
    %590 = vmatprep.subr.mxu0 0.0
    %591 = vmatpush2.msra.mxu0 0.0
    %592 = vmatprep.subr.mxu0 0.0
    %593 = vmatpush2.msra.mxu0 0.0
    %594 = vmatprep.subr.mxu0 0.0
    %595 = vmatpush2.msra.mxu0 0.0
    %596 = vmatprep.subr.mxu0 0.0
    %597 = vmatpush2.msra.mxu0 0.0
    %598 = vmatprep.subr.mxu0 0.0
    %599 = vmatpush2.msra.mxu0 0.0
    %600 = vmatprep.subr.mxu0 0.0
    %601 = vmatpush2.msra.mxu0 0.0
    %602 = vmatprep.subr.mxu0 0.0
    %603 = vmatpush2.msra.mxu0 0.0
    %604 = vmatprep.subr.mxu0 0.0
    %605 = vmatpush2.msra.mxu0 0.0
    %606 = vmatprep.subr.mxu0 0.0
    %607 = vmatpush2.msra.mxu0 0.0
    %608 = vmatprep.subr.mxu0 0.0
    %609 = vmatpush2.msra.mxu0 0.0
    %610 = vmatprep.subr.mxu0 0.0
    %611 = vmatpush2.msra.mxu0 0.0
    %612 = vmatprep.subr.mxu0 0.0
    %613 = vmatpush2.msra.mxu0 0.0
    %614 = vmatprep.subr.mxu0 0.0
    %615 = vmatpush2.msra.mxu0 0.0
    %616 = vmatprep.mubr.f32.mxu0 0.0
    %617 = vmatmul.mubr.f32.gmra.mxu0 %v547
    %v618 = vpop.f32.mrf.mxu0
    %v619 = vadd.f32 0.0, %v618
    %v620 = vpop.f32.mrf.mxu0
    %621 = vmatprep.mubr.f32.mxu0 0.0
    %622 = vmatmul.mubr.f32.gmra.mxu0 %v550
    %v623 = vpop.f32.mrf.mxu0
    %v624 = vadd.f32 0.0, %v623
    %v625 = vpop.f32.mrf.mxu0
    %626 = vdwg.mxu0
    %v627 = vadd.f32 %v535, %v619
    %v628 = vadd.f32 %v536, %v624
    %v629 = vmax.f32 %v627, 0.0
    %v630 = vmax.f32 %v628, 0.0
    %v631 = vmul.f32 %v629, %v325
    %v632 = vmul.f32 %v630, %v325
    %633 = vst.msk [vmem:[#allocation3 + $0x8] sm:$0xff] %vm329, %v631
    %634 = vst.msk [vmem:[#allocation3 + $0x18] sm:$0xff] %vm329, %v632
    %v635 = vld [vmem:[%s7] sm:$0xf]
    %v636 = vld [vmem:[%s6] sm:$0xf]
    %v637 = vld [vmem:[#allocation3] sm:$0xff]
    %v638 = vld [vmem:[#allocation3 + $0x8] sm:$0xff]
    %v639 = vld [vmem:[#allocation3 + $0x10] sm:$0xff]
    %v640 = vld [vmem:[#allocation3 + $0x18] sm:$0xff]
    %645 = vrot.lane.b32.xlu0 %v637, 1
    %v646 = vpop.permute.xlu0 %645
    %647 = vrot.lane.b32.xlu0 %v638, 1
    %v648 = vpop.permute.xlu0 %647
    %649 = vrot.lane.b32.xlu0 %v639, 1
    %v650 = vpop.permute.xlu0 %649
    %651 = vrot.lane.b32.xlu0 %v640, 1
    %v652 = vpop.permute.xlu0 %651
    %v653 = vsel %vm352, %v646, %v648
    %v654 = vsel %vm352, %v650, %v652
    %v658 = vsel %vm357, %v636, 0
    %660 = vmatprep.subr.mxu0 0.0
    %661 = vmatpush1.msra.mxu0 0.0
    %662 = vmatprep.subr.mxu0 0.0
    %663 = vmatpush1.msra.mxu0 0.0
    %664 = vmatprep.subr.mxu0 0.0
    %665 = vmatpush1.msra.mxu0 0.0
    %666 = vmatprep.subr.mxu0 0.0
    %667 = vmatpush1.msra.mxu0 0.0
    %668 = vmatprep.subr.mxu0 0.0
    %669 = vmatpush1.msra.mxu0 0.0
    %670 = vmatprep.subr.mxu0 0.0
    %671 = vmatpush1.msra.mxu0 0.0
    %672 = vmatprep.subr.mxu0 0.0
    %673 = vmatpush1.msra.mxu0 0.0
    %674 = vmatprep.subr.mxu0 0.0
    %675 = vmatpush1.msra.mxu0 0.0
    %676 = vmatprep.subr.mxu0 0.0
    %677 = vmatpush1.msra.mxu0 0.0
    %678 = vmatprep.subr.mxu0 0.0
    %679 = vmatpush1.msra.mxu0 0.0
    %680 = vmatprep.subr.mxu0 0.0
    %681 = vmatpush1.msra.mxu0 0.0
    %682 = vmatprep.subr.mxu0 0.0
    %683 = vmatpush1.msra.mxu0 0.0
    %684 = vmatprep.subr.mxu0 0.0
    %685 = vmatpush1.msra.mxu0 0.0
    %686 = vmatprep.subr.mxu0 0.0
    %687 = vmatpush1.msra.mxu0 0.0
    %688 = vmatprep.subr.mxu0 0.0
    %689 = vmatpush1.msra.mxu0 %v654
    %690 = vmatprep.subr.mxu0 0.0
    %691 = vmatpush1.msra.mxu0 %v653
    %692 = vmatprep.subr.mxu0 0.0
    %693 = vmatpush2.msra.mxu0 0.0
    %694 = vmatprep.subr.mxu0 0.0
    %695 = vmatpush2.msra.mxu0 0.0
    %696 = vmatprep.subr.mxu0 0.0
    %697 = vmatpush2.msra.mxu0 0.0
    %698 = vmatprep.subr.mxu0 0.0
    %699 = vmatpush2.msra.mxu0 0.0
    %700 = vmatprep.subr.mxu0 0.0
    %701 = vmatpush2.msra.mxu0 0.0
    %702 = vmatprep.subr.mxu0 0.0
    %703 = vmatpush2.msra.mxu0 0.0
    %704 = vmatprep.subr.mxu0 0.0
    %705 = vmatpush2.msra.mxu0 0.0
    %706 = vmatprep.subr.mxu0 0.0
    %707 = vmatpush2.msra.mxu0 0.0
    %708 = vmatprep.subr.mxu0 0.0
    %709 = vmatpush2.msra.mxu0 0.0
    %710 = vmatprep.subr.mxu0 0.0
    %711 = vmatpush2.msra.mxu0 0.0
    %712 = vmatprep.subr.mxu0 0.0
    %713 = vmatpush2.msra.mxu0 0.0
    %714 = vmatprep.subr.mxu0 0.0
    %715 = vmatpush2.msra.mxu0 0.0
    %716 = vmatprep.subr.mxu0 0.0
    %717 = vmatpush2.msra.mxu0 0.0
    %718 = vmatprep.subr.mxu0 0.0
    %719 = vmatpush2.msra.mxu0 0.0
    %720 = vmatprep.subr.mxu0 0.0
    %721 = vmatpush2.msra.mxu0 0.0
    %722 = vmatprep.subr.mxu0 0.0
    %723 = vmatpush2.msra.mxu0 0.0
    %724 = vmatprep.mubr.f32.mxu0 0.0
    %725 = vmatmul.mubr.f32.gmra.mxu0 %v658
    %v726 = vpop.f32.mrf.mxu0
    %v727 = vadd.f32 0.0, %v726
    %v728 = vpop.f32.mrf.mxu0
    %729 = vdwg.mxu0
    %731 = vset.pattern.permute.xlu0 0
    %732 = vperm.xlu0 %731, %v635
    %v733 = vpop.permute.xlu0 %732
    %v735 = vadd.f32 %v733, %v727
    %s736 = scalar_lea.vmem %s6, 4
    %v737 = vld [vmem:[%s736] sm:$0xf]
    %v739 = vsel %vm357, %v737, 0
    %741 = vmatprep.subr.mxu0 0.0
    %742 = vmatpush1.msra.mxu0 0.0
    %743 = vmatprep.subr.mxu0 0.0
    %744 = vmatpush1.msra.mxu0 0.0
    %745 = vmatprep.subr.mxu0 0.0
    %746 = vmatpush1.msra.mxu0 0.0
    %747 = vmatprep.subr.mxu0 0.0
    %748 = vmatpush1.msra.mxu0 0.0
    %749 = vmatprep.subr.mxu0 0.0
    %750 = vmatpush1.msra.mxu0 0.0
    %751 = vmatprep.subr.mxu0 0.0
    %752 = vmatpush1.msra.mxu0 0.0
    %753 = vmatprep.subr.mxu0 0.0
    %754 = vmatpush1.msra.mxu0 0.0
    %755 = vmatprep.subr.mxu0 0.0
    %756 = vmatpush1.msra.mxu0 0.0
    %757 = vmatprep.subr.mxu0 0.0
    %758 = vmatpush1.msra.mxu0 0.0
    %759 = vmatprep.subr.mxu0 0.0
    %760 = vmatpush1.msra.mxu0 0.0
    %761 = vmatprep.subr.mxu0 0.0
    %762 = vmatpush1.msra.mxu0 0.0
    %763 = vmatprep.subr.mxu0 0.0
    %764 = vmatpush1.msra.mxu0 0.0
    %765 = vmatprep.subr.mxu0 0.0
    %766 = vmatpush1.msra.mxu0 0.0
    %767 = vmatprep.subr.mxu0 0.0
    %768 = vmatpush1.msra.mxu0 0.0
    %769 = vmatprep.subr.mxu0 0.0
    %770 = vmatpush1.msra.mxu0 %v640
    %771 = vmatprep.subr.mxu0 0.0
    %772 = vmatpush1.msra.mxu0 %v638
    %773 = vmatprep.subr.mxu0 0.0
    %774 = vmatpush2.msra.mxu0 0.0
    %775 = vmatprep.subr.mxu0 0.0
    %776 = vmatpush2.msra.mxu0 0.0
    %777 = vmatprep.subr.mxu0 0.0
    %778 = vmatpush2.msra.mxu0 0.0
    %779 = vmatprep.subr.mxu0 0.0
    %780 = vmatpush2.msra.mxu0 0.0
    %781 = vmatprep.subr.mxu0 0.0
    %782 = vmatpush2.msra.mxu0 0.0
    %783 = vmatprep.subr.mxu0 0.0
    %784 = vmatpush2.msra.mxu0 0.0
    %785 = vmatprep.subr.mxu0 0.0
    %786 = vmatpush2.msra.mxu0 0.0
    %787 = vmatprep.subr.mxu0 0.0
    %788 = vmatpush2.msra.mxu0 0.0
    %789 = vmatprep.subr.mxu0 0.0
    %790 = vmatpush2.msra.mxu0 0.0
    %791 = vmatprep.subr.mxu0 0.0
    %792 = vmatpush2.msra.mxu0 0.0
    %793 = vmatprep.subr.mxu0 0.0
    %794 = vmatpush2.msra.mxu0 0.0
    %795 = vmatprep.subr.mxu0 0.0
    %796 = vmatpush2.msra.mxu0 0.0
    %797 = vmatprep.subr.mxu0 0.0
    %798 = vmatpush2.msra.mxu0 0.0
    %799 = vmatprep.subr.mxu0 0.0
    %800 = vmatpush2.msra.mxu0 0.0
    %801 = vmatprep.subr.mxu0 0.0
    %802 = vmatpush2.msra.mxu0 0.0
    %803 = vmatprep.subr.mxu0 0.0
    %804 = vmatpush2.msra.mxu0 0.0
    %805 = vmatprep.mubr.f32.mxu0 0.0
    %806 = vmatmul.mubr.f32.gmra.mxu0 %v739
    %v807 = vpop.f32.mrf.mxu0
    %v808 = vadd.f32 0.0, %v807
    %v809 = vpop.f32.mrf.mxu0
    %810 = vdwg.mxu0
    %v811 = vadd.f32 %v735, %v808
    %s812 = scalar_lea.vmem %s6, 8
    %v813 = vld [vmem:[%s812] sm:$0xf]
    %814 = vrot.lane.b32.xlu0 %v638, 127
    %v815 = vpop.permute.xlu0 %814
    %816 = vrot.lane.b32.xlu0 %v640, 127
    %v817 = vpop.permute.xlu0 %816
    %v821 = vsel %vm357, %v813, 0
    %823 = vmatprep.subr.mxu0 0.0
    %824 = vmatpush1.msra.mxu0 0.0
    %825 = vmatprep.subr.mxu0 0.0
    %826 = vmatpush1.msra.mxu0 0.0
    %827 = vmatprep.subr.mxu0 0.0
    %828 = vmatpush1.msra.mxu0 0.0
    %829 = vmatprep.subr.mxu0 0.0
    %830 = vmatpush1.msra.mxu0 0.0
    %831 = vmatprep.subr.mxu0 0.0
    %832 = vmatpush1.msra.mxu0 0.0
    %833 = vmatprep.subr.mxu0 0.0
    %834 = vmatpush1.msra.mxu0 0.0
    %835 = vmatprep.subr.mxu0 0.0
    %836 = vmatpush1.msra.mxu0 0.0
    %837 = vmatprep.subr.mxu0 0.0
    %838 = vmatpush1.msra.mxu0 0.0
    %839 = vmatprep.subr.mxu0 0.0
    %840 = vmatpush1.msra.mxu0 0.0
    %841 = vmatprep.subr.mxu0 0.0
    %842 = vmatpush1.msra.mxu0 0.0
    %843 = vmatprep.subr.mxu0 0.0
    %844 = vmatpush1.msra.mxu0 0.0
    %845 = vmatprep.subr.mxu0 0.0
    %846 = vmatpush1.msra.mxu0 0.0
    %847 = vmatprep.subr.mxu0 0.0
    %848 = vmatpush1.msra.mxu0 0.0
    %849 = vmatprep.subr.mxu0 0.0
    %850 = vmatpush1.msra.mxu0 0.0
    %851 = vmatprep.subr.mxu0 0.0
    %852 = vmatpush1.msra.mxu0 %v817
    %853 = vmatprep.subr.mxu0 0.0
    %854 = vmatpush1.msra.mxu0 %v815
    %855 = vmatprep.subr.mxu0 0.0
    %856 = vmatpush2.msra.mxu0 0.0
    %857 = vmatprep.subr.mxu0 0.0
    %858 = vmatpush2.msra.mxu0 0.0
    %859 = vmatprep.subr.mxu0 0.0
    %860 = vmatpush2.msra.mxu0 0.0
    %861 = vmatprep.subr.mxu0 0.0
    %862 = vmatpush2.msra.mxu0 0.0
    %863 = vmatprep.subr.mxu0 0.0
    %864 = vmatpush2.msra.mxu0 0.0
    %865 = vmatprep.subr.mxu0 0.0
    %866 = vmatpush2.msra.mxu0 0.0
    %867 = vmatprep.subr.mxu0 0.0
    %868 = vmatpush2.msra.mxu0 0.0
    %869 = vmatprep.subr.mxu0 0.0
    %870 = vmatpush2.msra.mxu0 0.0
    %871 = vmatprep.subr.mxu0 0.0
    %872 = vmatpush2.msra.mxu0 0.0
    %873 = vmatprep.subr.mxu0 0.0
    %874 = vmatpush2.msra.mxu0 0.0
    %875 = vmatprep.subr.mxu0 0.0
    %876 = vmatpush2.msra.mxu0 0.0
    %877 = vmatprep.subr.mxu0 0.0
    %878 = vmatpush2.msra.mxu0 0.0
    %879 = vmatprep.subr.mxu0 0.0
    %880 = vmatpush2.msra.mxu0 0.0
    %881 = vmatprep.subr.mxu0 0.0
    %882 = vmatpush2.msra.mxu0 0.0
    %883 = vmatprep.subr.mxu0 0.0
    %884 = vmatpush2.msra.mxu0 0.0
    %885 = vmatprep.subr.mxu0 0.0
    %886 = vmatpush2.msra.mxu0 0.0
    %887 = vmatprep.mubr.f32.mxu0 0.0
    %888 = vmatmul.mubr.f32.gmra.mxu0 %v821
    %v889 = vpop.f32.mrf.mxu0
    %v890 = vadd.f32 0.0, %v889
    %v891 = vpop.f32.mrf.mxu0
    %892 = vdwg.mxu0
    %v893 = vadd.f32 %v811, %v890
    %vm894 = vcmask 273408
    %895 = vst.msk [vmem:[#allocation4] sm:$0xf] %vm894, %v893
    // Predicated region
    $region34: #{tpu_custom_call.1} parent=1 // pred_check
      _
    $region35: #{tpu_custom_call.1} parent=1 // pred_check_branch
      %897 = sbr.rel (0) target = $region37
    $region36: #{tpu_custom_call.1} parent=1 // pred_region
      %s899 = ssub.s32 64, 64
      %900 = vsyncadd [#allocation5], %s899
      %s902 = sshll.u32 [#allocation4], 4
      %s903 = int_to_ptr.vmem [resolvable:$true] %s902
      %905 = dma.vmem_to_hbm [thread:$0]  %s903, 64, %s8, [#allocation5]
    $region37: #{tpu_custom_call.1} parent=1 // pred_fallthru
      _
    // Predicated region
    $region38: #{tpu_custom_call.1} parent=1 // pred_check
      _
    $region39: #{tpu_custom_call.1} parent=1 // pred_check_branch
      %907 = sbr.rel (0) target = $region41
    $region40: #{tpu_custom_call.1} parent=1 // pred_region
      %908 = dma.done [#allocation5], 64
    $region41: #{tpu_custom_call.1} parent=1 // pred_fallthru
      _
    %909 = vsyncpa [#allocation5], 1

</llo_original>
